<compile_context>
chip_gen: v6e
topology: v6e:2x2x1
jax: 0.10.0
libtpu: 0.0.40
codegen_flags: <defaults>
</compile_context>

<pallas_src>
import functools
import math

import jax
import jax.numpy as jnp
from jax.experimental import pallas as pl
from jax.experimental.pallas import tpu as pltpu

_SUBLANE = 8
_LANE = 128
_MAX_BATCH_TILE = 256   # v6e/v7x MXU M width; modest enough for v5e VMEM / vst.


# ----------------------------------------------------------------------------
# Kernel
# ----------------------------------------------------------------------------
def _apply_act(y, activation):
    # `y` is the float32 MXU accumulator; the activation is computed in f32 on
    # every chip (v5e has no bf16 VPU/EUP) — only the result is narrowed later.
    if activation == "tanh":
        return jnp.tanh(y)            # EUP slot
    if activation == "relu":
        return jnp.maximum(y, 0.0)
    if activation == "sigmoid":
        return jax.nn.sigmoid(y)
    if activation == "gelu":
        return jax.nn.gelu(y)
    if activation == "elu":
        return jax.nn.elu(y)
    if activation == "softplus":
        return jax.nn.softplus(y)
    raise ValueError(f"Unsupported activation for Pallas MLP kernel: {activation!r}")


def _fused_mlp_kernel(*refs, num_hidden, activation):
    """out = heads(act(... act(x @ W0 + b0) ...)) for one batch tile."""
    x_ref = refs[0]
    out_ref = refs[-1]
    wb = refs[1:-1]                     # (w0, b0, w1, b1, ..., w_heads, b_heads)

    h = x_ref[...]                      # bf16 tile straight off DMA
    for layer in range(num_hidden):
        w_ref = wb[2 * layer]
        b_ref = wb[2 * layer + 1]
        y = jnp.dot(h, w_ref[...], preferred_element_type=jnp.float32)  # bf16 MXU, f32 acc
        y = y + b_ref[...]                                              # bias add in f32
        # Activation on the f32 accumulator; keep the inter-layer activation
        # in bf16 so the live intermediate footprint (and spill) is halved.
        h = _apply_act(y, activation).astype(w_ref.dtype)

    wh_ref = wb[2 * num_hidden]
    bh_ref = wb[2 * num_hidden + 1]
    out = jnp.dot(h, wh_ref[...], preferred_element_type=jnp.float32) + bh_ref[...]
    out_ref[...] = out.astype(out_ref.dtype)        # lane-dense (128-wide) store


# ----------------------------------------------------------------------------
# Wrapper
# ----------------------------------------------------------------------------
def _batch_tile(batch):
    if batch <= _MAX_BATCH_TILE:
        return -(-batch // _SUBLANE) * _SUBLANE      # one sublane-padded tile
    return _MAX_BATCH_TILE


def mlp_forward(params, x, act_fn="tanh", code_size=None):
    """Matches PyTorch MLP.forward: returns (mean, log_var)."""
    batch = x.shape[0]
    data_size = math.prod(x.shape[1:])               # static, from the array shape

    fcs = params["fc"]
    wh, bh = params["fc_heads"]                      # concatenated + lane-padded head
    out_width = wh.shape[1]                          # multiple of 128

    # Flatten + cast to the weight dtype (bf16).  Layer-0 math is bf16 anyway,
    # and this halves the per-tile input DMA.  Under jit the reshape / cast /
    # (optional) pad fuse into a single HBM copy; pad is skipped when not needed.
    h = x.reshape(batch, data_size).astype(wh.dtype)
    tb = _batch_tile(batch)
    b_pad = -(-batch // tb) * tb
    if b_pad != batch:
        h = jnp.pad(h, ((0, b_pad - batch), (0, 0)))

    args = [h]
    in_specs = [pl.BlockSpec((tb, data_size), lambda i: (i, 0))]
    for w, b in list(fcs) + [(wh, bh)]:
        args += [w, b]
        # Constant index_map => each weight/bias is DMA'd into VMEM once and
        # stays resident across batch tiles.
        # TODO(synk): pipeline_mode=pl.Buffered(1) would also drop their double
        # buffers; skipped since the whole weight stack is only ~0.6 MiB.
        in_specs += [pl.BlockSpec(w.shape, lambda i: (0, 0)),
                     pl.BlockSpec(b.shape, lambda i: (0, 0))]

    # Advisory cost estimate so XLA can overlap this small op with neighbours.
    flops = 0
    transcendentals = 0
    for w, _ in fcs:
        flops += 2 * b_pad * w.shape[0] * w.shape[1]
        transcendentals += b_pad * w.shape[1]
    flops += 2 * b_pad * wh.shape[0] * wh.shape[1]
    bytes_accessed = int(
        h.size * h.dtype.itemsize + b_pad * out_width * 4
        + sum(int(w.size) * w.dtype.itemsize + int(b.size) * b.dtype.itemsize
              for w, b in list(fcs) + [(wh, bh)]))

    out = pl.pallas_call(
        functools.partial(_fused_mlp_kernel,
                          num_hidden=len(fcs), activation=act_fn),
        out_shape=jax.ShapeDtypeStruct((b_pad, out_width), jnp.float32),
        grid=(b_pad // tb,),
        in_specs=in_specs,
        out_specs=pl.BlockSpec((tb, out_width), lambda i: (i, 0)),
        # TODO(synk): on v7x use pltpu.CORE_PARALLEL on the batch axis once the
        # grid has >= 2 tiles; "parallel" is the portable choice across chips.
        compiler_params=pltpu.CompilerParams(
            dimension_semantics=("parallel",)),
        cost_estimate=pl.CostEstimate(flops=flops,
                                      transcendentals=transcendentals,
                                      bytes_accessed=bytes_accessed),
    )(*args)

    out = out[:batch]
    return out[:, :code_size], out[:, code_size:2 * code_size]


# ----------------------------------------------------------------------------
# Parameter init (mimics nn.Linear's U(-1/sqrt(fan_in), 1/sqrt(fan_in)))
# ----------------------------------------------------------------------------
def init_mlp_params(key, data_shape, code_size, widths, w_dtype=jnp.bfloat16):
    data_size = math.prod(data_shape)
    dims = [data_size] + [int(w) for w in widths]
    params = {"fc": []}
    for i in range(len(dims) - 1):
        key, kw, kb = jax.random.split(key, 3)
        bound = 1.0 / math.sqrt(dims[i])
        w = jax.random.uniform(kw, (dims[i], dims[i + 1]), jnp.float32, -bound, bound)
        b = jax.random.uniform(kb, (1, dims[i + 1]), jnp.float32, -bound, bound)
        params["fc"].append((w.astype(w_dtype), b))
    bound = 1.0 / math.sqrt(dims[-1])
    key, k1, k2, k3, k4 = jax.random.split(key, 5)
    wm = jax.random.uniform(k1, (dims[-1], code_size), jnp.float32, -bound, bound)
    bm = jax.random.uniform(k2, (1, code_size), jnp.float32, -bound, bound)
    wv = jax.random.uniform(k3, (dims[-1], code_size), jnp.float32, -bound, bound)
    bv = jax.random.uniform(k4, (1, code_size), jnp.float32, -bound, bound)
    # Concatenate the two heads (one MXU push) and zero-pad the output width to
    # a multiple of 128 lanes so the kernel's final store is lane-dense.
    wh = jnp.concatenate([wm, wv], axis=1)
    bh = jnp.concatenate([bm, bv], axis=1)
    pad = -(-wh.shape[1] // _LANE) * _LANE - wh.shape[1]
    if pad:
        wh = jnp.pad(wh, ((0, 0), (0, pad)))
        bh = jnp.pad(bh, ((0, 0), (0, pad)))
    params["fc_heads"] = (wh.astype(w_dtype), bh)
    return params


# ----------------------------------------------------------------------------
# Reference (pure JAX, identical bf16 math path) for sanity checking
# ----------------------------------------------------------------------------
def mlp_forward_ref(params, x, act_fn="tanh", code_size=None):
    batch = x.shape[0]
    wh, bh = params["fc_heads"]
    h = x.reshape(batch, -1).astype(wh.dtype)
    for w, b in params["fc"]:
        y = jnp.dot(h, w, preferred_element_type=jnp.float32) + b
        h = _apply_act(y, act_fn).astype(w.dtype)
    out = jnp.dot(h, wh, preferred_element_type=jnp.float32) + bh
    return out[:, :code_size], out[:, code_size:2 * code_size]


if __name__ == "__main__":
    key = jax.random.PRNGKey(0)
    key, kx, kp = jax.random.split(key, 3)

    # Module config: data_shape=(4,16,16) -> data_size=1024,
    # widths=['256','128'], code_size=32, batch=2.
    data_shape = (4, 16, 16)
    code_size = 32
    widths = ["256", "128"]
    B = 2

    x = jax.random.normal(kx, (B,) + data_shape, jnp.float32)   # NCHW input
    params = init_mlp_params(kp, data_shape, code_size, widths)

    fwd = jax.jit(functools.partial(mlp_forward, act_fn="tanh", code_size=code_size))
    mean, log_var = fwd(params, x)
    jax.block_until_ready((mean, log_var))

    mean_ref, log_var_ref = mlp_forward_ref(params, x, act_fn="tanh",
                                            code_size=code_size)
    assert mean.shape == (B, code_size) and log_var.shape == (B, code_size)
    assert jnp.allclose(mean, mean_ref, atol=1e-2, rtol=1e-2)
    assert jnp.allclose(log_var, log_var_ref, atol=1e-2, rtol=1e-2)

    print("KERNEL_OK")
</pallas_src>

<mosaic_0001>
module attributes {stable_mosaic.version = 11 : i64} {
  func.func @_fused_mlp_kernel(%arg0: i32, %arg1: memref<8x1024xbf16, #tpu.memory_space<vmem>>, %arg2: memref<1024x256xbf16, #tpu.memory_space<vmem>>, %arg3: memref<1x256xf32, #tpu.memory_space<vmem>>, %arg4: memref<256x128xbf16, #tpu.memory_space<vmem>>, %arg5: memref<1x128xf32, #tpu.memory_space<vmem>>, %arg6: memref<128x128xbf16, #tpu.memory_space<vmem>>, %arg7: memref<1x128xf32, #tpu.memory_space<vmem>>, %arg8: memref<8x128xf32, #tpu.memory_space<vmem>>) attributes {dimension_semantics = [#tpu.dimension_semantics<parallel>], iteration_bounds = array<i64: 1>, scalar_prefetch = 0 : i64, scratch_operands = 0 : i64, tpu.core_type = #tpu.core_type<tc>, window_params = [{transform_indices = @transform_0, window_bounds = array<i64: 8, 1024>}, {pipeline_mode = #tpu.pipeline_mode<synchronous>, transform_indices = @transform_1, window_bounds = array<i64: 1024, 256>}, {pipeline_mode = #tpu.pipeline_mode<synchronous>, transform_indices = @transform_2, window_bounds = array<i64: 1, 256>}, {pipeline_mode = #tpu.pipeline_mode<synchronous>, transform_indices = @transform_3, window_bounds = array<i64: 256, 128>}, {pipeline_mode = #tpu.pipeline_mode<synchronous>, transform_indices = @transform_4, window_bounds = array<i64: 1, 128>}, {pipeline_mode = #tpu.pipeline_mode<synchronous>, transform_indices = @transform_5, window_bounds = array<i64: 128, 128>}, {pipeline_mode = #tpu.pipeline_mode<synchronous>, transform_indices = @transform_6, window_bounds = array<i64: 1, 128>}, {transform_indices = @transform_7, window_bounds = array<i64: 8, 128>}]} {
    %c0 = arith.constant 0 : index
    %c0_0 = arith.constant 0 : index
    %0 = vector.load %arg1[%c0, %c0_0] : memref<8x1024xbf16, #tpu.memory_space<vmem>>, vector<8x1024xbf16>
    %c0_1 = arith.constant 0 : index
    %c0_2 = arith.constant 0 : index
    %1 = vector.load %arg2[%c0_1, %c0_2] : memref<1024x256xbf16, #tpu.memory_space<vmem>>, vector<1024x256xbf16>
    %cst = arith.constant dense<0.000000e+00> : vector<8x256xf32>
    %2 = tpu.matmul %0, %1, %cst {dimension_numbers = #tpu.dot_dimension_numbers<[1], [0], [0], [1], [0, 0, 1, 1], [], []>} : vector<8x1024xbf16>, vector<1024x256xbf16>, vector<8x256xf32> -> vector<8x256xf32>
    %c0_3 = arith.constant 0 : index
    %c0_4 = arith.constant 0 : index
    %3 = vector.load %arg3[%c0_3, %c0_4] : memref<1x256xf32, #tpu.memory_space<vmem>>, vector<1x256xf32>
    %4 = vector.broadcast %3 : vector<1x256xf32> to vector<8x256xf32>
    %5 = arith.addf %2, %4 : vector<8x256xf32>
    %6 = math.tanh %5 : vector<8x256xf32>
    %7 = arith.truncf %6 : vector<8x256xf32> to vector<8x256xbf16>
    %c0_5 = arith.constant 0 : index
    %c0_6 = arith.constant 0 : index
    %8 = vector.load %arg4[%c0_5, %c0_6] : memref<256x128xbf16, #tpu.memory_space<vmem>>, vector<256x128xbf16>
    %cst_7 = arith.constant dense<0.000000e+00> : vector<8x128xf32>
    %9 = tpu.matmul %7, %8, %cst_7 {dimension_numbers = #tpu.dot_dimension_numbers<[1], [0], [0], [1], [0, 0, 1, 1], [], []>} : vector<8x256xbf16>, vector<256x128xbf16>, vector<8x128xf32> -> vector<8x128xf32>
    %c0_8 = arith.constant 0 : index
    %c0_9 = arith.constant 0 : index
    %10 = vector.load %arg5[%c0_8, %c0_9] : memref<1x128xf32, #tpu.memory_space<vmem>>, vector<1x128xf32>
    %11 = vector.broadcast %10 : vector<1x128xf32> to vector<8x128xf32>
    %12 = arith.addf %9, %11 : vector<8x128xf32>
    %13 = math.tanh %12 : vector<8x128xf32>
    %14 = arith.truncf %13 : vector<8x128xf32> to vector<8x128xbf16>
    %c0_10 = arith.constant 0 : index
    %c0_11 = arith.constant 0 : index
    %15 = vector.load %arg6[%c0_10, %c0_11] : memref<128x128xbf16, #tpu.memory_space<vmem>>, vector<128x128xbf16>
    %cst_12 = arith.constant dense<0.000000e+00> : vector<8x128xf32>
    %16 = tpu.matmul %14, %15, %cst_12 {dimension_numbers = #tpu.dot_dimension_numbers<[1], [0], [0], [1], [0, 0, 1, 1], [], []>} : vector<8x128xbf16>, vector<128x128xbf16>, vector<8x128xf32> -> vector<8x128xf32>
    %c0_13 = arith.constant 0 : index
    %c0_14 = arith.constant 0 : index
    %17 = vector.load %arg7[%c0_13, %c0_14] : memref<1x128xf32, #tpu.memory_space<vmem>>, vector<1x128xf32>
    %18 = vector.broadcast %17 : vector<1x128xf32> to vector<8x128xf32>
    %19 = arith.addf %16, %18 : vector<8x128xf32>
    %c0_15 = arith.constant 0 : index
    %c0_16 = arith.constant 0 : index
    %20 = vector.load %arg8[%c0_15, %c0_16] : memref<8x128xf32, #tpu.memory_space<vmem>>, vector<8x128xf32>
    tpu.vector_store %arg8[%c0_15, %c0_16], %19 {strides = array<i32>} : memref<8x128xf32, #tpu.memory_space<vmem>>, vector<8x128xf32>,
    return
  }
  func.func @transform_0(%arg0: i32) -> (i32, i32) {
    %c0_i32 = arith.constant 0 : i32
    %c0_i32_0 = arith.constant 0 : i32
    return %arg0, %c0_i32 : i32, i32
  }
  func.func @transform_1(%arg0: i32) -> (i32, i32) {
    %c0_i32 = arith.constant 0 : i32
    %c0_i32_0 = arith.constant 0 : i32
    %c0_i32_1 = arith.constant 0 : i32
    return %c0_i32, %c0_i32_0 : i32, i32
  }
  func.func @transform_2(%arg0: i32) -> (i32, i32) {
    %c0_i32 = arith.constant 0 : i32
    %c0_i32_0 = arith.constant 0 : i32
    %c0_i32_1 = arith.constant 0 : i32
    return %c0_i32, %c0_i32_0 : i32, i32
  }
  func.func @transform_3(%arg0: i32) -> (i32, i32) {
    %c0_i32 = arith.constant 0 : i32
    %c0_i32_0 = arith.constant 0 : i32
    %c0_i32_1 = arith.constant 0 : i32
    return %c0_i32, %c0_i32_0 : i32, i32
  }
  func.func @transform_4(%arg0: i32) -> (i32, i32) {
    %c0_i32 = arith.constant 0 : i32
    %c0_i32_0 = arith.constant 0 : i32
    %c0_i32_1 = arith.constant 0 : i32
    return %c0_i32, %c0_i32_0 : i32, i32
  }
  func.func @transform_5(%arg0: i32) -> (i32, i32) {
    %c0_i32 = arith.constant 0 : i32
    %c0_i32_0 = arith.constant 0 : i32
    %c0_i32_1 = arith.constant 0 : i32
    return %c0_i32, %c0_i32_0 : i32, i32
  }
  func.func @transform_6(%arg0: i32) -> (i32, i32) {
    %c0_i32 = arith.constant 0 : i32
    %c0_i32_0 = arith.constant 0 : i32
    %c0_i32_1 = arith.constant 0 : i32
    return %c0_i32, %c0_i32_0 : i32, i32
  }
  func.func @transform_7(%arg0: i32) -> (i32, i32) {
    %c0_i32 = arith.constant 0 : i32
    %c0_i32_0 = arith.constant 0 : i32
    return %arg0, %c0_i32 : i32, i32
  }
}

</mosaic_0001>

<llo_original>
// kernel: mlp_forward.1
$region0: #{mlp_forward.1}
  #allocation0 [shape = 'u32[]', space=smem, size = 0x4, offset = 0x4, fixed_abs, tag = 'smem constant byte address 0x4 - core index']
  #allocation1 [shape = 'u32[144,128]{1,0:T(1,128)}', space=vmem, size = 0x12000, scoped, tag = 'internal scratch']
  %s0 = inlined_call_operand.vmem [shape: bf16[8,1024], index: 0, kind: input, shape index: {}]
  %s1 = inlined_call_operand.hbm [shape: bf16[1024,256], index: 1, kind: input, shape index: {}]
  %s2 = inlined_call_operand.vmem [shape: f32[1,256], index: 2, kind: input, shape index: {}]
  %s3 = inlined_call_operand.vmem [shape: bf16[256,128], index: 3, kind: input, shape index: {}]
  %s4 = inlined_call_operand.vmem [shape: f32[1,128], index: 4, kind: input, shape index: {}]
  %s5 = inlined_call_operand.vmem [shape: bf16[128,128], index: 5, kind: input, shape index: {}]
  %s6 = inlined_call_operand.vmem [shape: f32[1,128], index: 6, kind: input, shape index: {}]
  %s7 = inlined_call_operand.vmem [shape: f32[8,128], index: 7, kind: output, shape index: {}]
  %s8 = sld [smem:[#allocation0]]
  $region42: #{mlp_forward.1} parent=0
    _
  %s10 = ssub.s32 1, %s8
  %s11 = scalar_select 0, %s10, %s8
  $region1: #{mlp_forward.1} parent=0
    #allocation2 [shape = 'u8[524288]{0}', space=vmem, size = 0x80000, scoped, tag = 'input window, operand 1, single buffered']
    #allocation3 [shape = 's32[1]{0}', space=sflag, size = 0x4, scoped, tag = 'scoped memory for mlp_forward.1']
    %12 = vsyncpa [#allocation3], 0
    // Predicated region
    $region2: #{mlp_forward.1} parent=1 // pred_check
      _
    $region3: #{mlp_forward.1} parent=1 // pred_check_branch
      %14 = sbr.rel (0) target = $region5
    $region4: #{mlp_forward.1} parent=1 // pred_region
      _
    $region5: #{mlp_forward.1} parent=1 // pred_fallthru
      _
    // Predicated region
    $region6: #{mlp_forward.1} parent=1 // pred_check
      _
    $region7: #{mlp_forward.1} parent=1 // pred_check_branch
      %16 = sbr.rel (0) target = $region9
    $region8: #{mlp_forward.1} parent=1 // pred_region
      %s18 = ssub.s32 16384, 16384
      %19 = vsyncadd [#allocation3], %s18
      %s20 = sshll.u32 [#allocation2], 4
      %s21 = int_to_ptr.vmem [resolvable:$true] %s20
      %26 = dma.hbm_to_vmem [thread:$0]  %s1, 16384, %s21, [#allocation3], 128, 128, 8
    $region9: #{mlp_forward.1} parent=1 // pred_fallthru
      _
    // Predicated region
    $region10: #{mlp_forward.1} parent=1 // pred_check
      _
    $region11: #{mlp_forward.1} parent=1 // pred_check_branch
      %28 = sbr.rel (0) target = $region13
    $region12: #{mlp_forward.1} parent=1 // pred_region
      _
    $region13: #{mlp_forward.1} parent=1 // pred_fallthru
      _
    // Predicated region
    $region14: #{mlp_forward.1} parent=1 // pred_check
      _
    $region15: #{mlp_forward.1} parent=1 // pred_check_branch
      %30 = sbr.rel (0) target = $region17
    $region16: #{mlp_forward.1} parent=1 // pred_region
      _
    $region17: #{mlp_forward.1} parent=1 // pred_fallthru
      _
    // Predicated region
    $region18: #{mlp_forward.1} parent=1 // pred_check
      _
    $region19: #{mlp_forward.1} parent=1 // pred_check_branch
      %32 = sbr.rel (0) target = $region21
    $region20: #{mlp_forward.1} parent=1 // pred_region
      _
    $region21: #{mlp_forward.1} parent=1 // pred_fallthru
      _
    // Predicated region
    $region22: #{mlp_forward.1} parent=1 // pred_check
      _
    $region23: #{mlp_forward.1} parent=1 // pred_check_branch
      %34 = sbr.rel (0) target = $region25
    $region24: #{mlp_forward.1} parent=1 // pred_region
      _
    $region25: #{mlp_forward.1} parent=1 // pred_fallthru
      _
    // Predicated region
    $region26: #{mlp_forward.1} parent=1 // pred_check
      _
    $region27: #{mlp_forward.1} parent=1 // pred_check_branch
      %36 = sbr.rel (0) target = $region29
    $region28: #{mlp_forward.1} parent=1 // pred_region
      _
    $region29: #{mlp_forward.1} parent=1 // pred_fallthru
      _
    // Predicated region
    $region30: #{mlp_forward.1} parent=1 // pred_check
      _
    $region31: #{mlp_forward.1} parent=1 // pred_check_branch
      %38 = sbr.rel (0) target = $region33
    $region32: #{mlp_forward.1} parent=1 // pred_region
      %39 = dma.done [#allocation3], 16384
    $region33: #{mlp_forward.1} parent=1 // pred_fallthru
      _
    %v41 = vld [vmem:[%s0] sm:$0xff]
    %v42 = vld [vmem:[%s0 + $0x8] sm:$0xff]
    %v43 = vld [vmem:[%s0 + $0x10] sm:$0xff]
    %v44 = vld [vmem:[%s0 + $0x18] sm:$0xff]
    %v45 = vld [vmem:[#allocation2] sm:$0xff]
    %v46 = vld [vmem:[#allocation2 + $0x8] sm:$0xff]
    %v47 = vld [vmem:[#allocation2 + $0x10] sm:$0xff]
    %v48 = vld [vmem:[#allocation2 + $0x18] sm:$0xff]
    %v49 = vld [vmem:[#allocation2 + $0x20] sm:$0xff]
    %v50 = vld [vmem:[#allocation2 + $0x28] sm:$0xff]
    %v51 = vld [vmem:[#allocation2 + $0x30] sm:$0xff]
    %v52 = vld [vmem:[#allocation2 + $0x38] sm:$0xff]
    %v53 = vld [vmem:[#allocation2 + $0x40] sm:$0xff]
    %v54 = vld [vmem:[#allocation2 + $0x48] sm:$0xff]
    %v55 = vld [vmem:[#allocation2 + $0x50] sm:$0xff]
    %v56 = vld [vmem:[#allocation2 + $0x58] sm:$0xff]
    %v57 = vld [vmem:[#allocation2 + $0x60] sm:$0xff]
    %v58 = vld [vmem:[#allocation2 + $0x68] sm:$0xff]
    %v59 = vld [vmem:[#allocation2 + $0x70] sm:$0xff]
    %v60 = vld [vmem:[#allocation2 + $0x78] sm:$0xff]
    %v61 = vld [vmem:[#allocation2 + $0x80] sm:$0xff]
    %v62 = vld [vmem:[#allocation2 + $0x88] sm:$0xff]
    %v63 = vld [vmem:[#allocation2 + $0x90] sm:$0xff]
    %v64 = vld [vmem:[#allocation2 + $0x98] sm:$0xff]
    %v65 = vld [vmem:[#allocation2 + $0xa0] sm:$0xff]
    %v66 = vld [vmem:[#allocation2 + $0xa8] sm:$0xff]
    %v67 = vld [vmem:[#allocation2 + $0xb0] sm:$0xff]
    %v68 = vld [vmem:[#allocation2 + $0xb8] sm:$0xff]
    %v69 = vld [vmem:[#allocation2 + $0xc0] sm:$0xff]
    %v70 = vld [vmem:[#allocation2 + $0xc8] sm:$0xff]
    %v71 = vld [vmem:[#allocation2 + $0xd0] sm:$0xff]
    %v72 = vld [vmem:[#allocation2 + $0xd8] sm:$0xff]
    %v73 = vld [vmem:[#allocation2 + $0xe0] sm:$0xff]
    %v74 = vld [vmem:[#allocation2 + $0xe8] sm:$0xff]
    %v75 = vld [vmem:[#allocation2 + $0xf0] sm:$0xff]
    %v76 = vld [vmem:[#allocation2 + $0xf8] sm:$0xff]
    %v77 = vld [vmem:[#allocation2 + $0x100] sm:$0xff]
    %v78 = vld [vmem:[#allocation2 + $0x108] sm:$0xff]
    %v79 = vld [vmem:[#allocation2 + $0x110] sm:$0xff]
    %v80 = vld [vmem:[#allocation2 + $0x118] sm:$0xff]
    %v81 = vld [vmem:[#allocation2 + $0x120] sm:$0xff]
    %v82 = vld [vmem:[#allocation2 + $0x128] sm:$0xff]
    %v83 = vld [vmem:[#allocation2 + $0x130] sm:$0xff]
    %v84 = vld [vmem:[#allocation2 + $0x138] sm:$0xff]
    %v85 = vld [vmem:[#allocation2 + $0x140] sm:$0xff]
    %v86 = vld [vmem:[#allocation2 + $0x148] sm:$0xff]
    %v87 = vld [vmem:[#allocation2 + $0x150] sm:$0xff]
    %v88 = vld [vmem:[#allocation2 + $0x158] sm:$0xff]
    %v89 = vld [vmem:[#allocation2 + $0x160] sm:$0xff]
    %v90 = vld [vmem:[#allocation2 + $0x168] sm:$0xff]
    %v91 = vld [vmem:[#allocation2 + $0x170] sm:$0xff]
    %v92 = vld [vmem:[#allocation2 + $0x178] sm:$0xff]
    %v93 = vld [vmem:[#allocation2 + $0x180] sm:$0xff]
    %v94 = vld [vmem:[#allocation2 + $0x188] sm:$0xff]
    %v95 = vld [vmem:[#allocation2 + $0x190] sm:$0xff]
    %v96 = vld [vmem:[#allocation2 + $0x198] sm:$0xff]
    %v97 = vld [vmem:[#allocation2 + $0x1a0] sm:$0xff]
    %v98 = vld [vmem:[#allocation2 + $0x1a8] sm:$0xff]
    %v99 = vld [vmem:[#allocation2 + $0x1b0] sm:$0xff]
    %v100 = vld [vmem:[#allocation2 + $0x1b8] sm:$0xff]
    %v101 = vld [vmem:[#allocation2 + $0x1c0] sm:$0xff]
    %v102 = vld [vmem:[#allocation2 + $0x1c8] sm:$0xff]
    %v103 = vld [vmem:[#allocation2 + $0x1d0] sm:$0xff]
    %v104 = vld [vmem:[#allocation2 + $0x1d8] sm:$0xff]
    %v105 = vld [vmem:[#allocation2 + $0x1e0] sm:$0xff]
    %v106 = vld [vmem:[#allocation2 + $0x1e8] sm:$0xff]
    %v107 = vld [vmem:[#allocation2 + $0x1f0] sm:$0xff]
    %v108 = vld [vmem:[#allocation2 + $0x1f8] sm:$0xff]
    %v109 = vld [vmem:[#allocation2 + $0x200] sm:$0xff]
    %v110 = vld [vmem:[#allocation2 + $0x208] sm:$0xff]
    %v111 = vld [vmem:[#allocation2 + $0x210] sm:$0xff]
    %v112 = vld [vmem:[#allocation2 + $0x218] sm:$0xff]
    %v113 = vld [vmem:[#allocation2 + $0x220] sm:$0xff]
    %v114 = vld [vmem:[#allocation2 + $0x228] sm:$0xff]
    %v115 = vld [vmem:[#allocation2 + $0x230] sm:$0xff]
    %v116 = vld [vmem:[#allocation2 + $0x238] sm:$0xff]
    %v117 = vld [vmem:[#allocation2 + $0x240] sm:$0xff]
    %v118 = vld [vmem:[#allocation2 + $0x248] sm:$0xff]
    %v119 = vld [vmem:[#allocation2 + $0x250] sm:$0xff]
    %v120 = vld [vmem:[#allocation2 + $0x258] sm:$0xff]
    %v121 = vld [vmem:[#allocation2 + $0x260] sm:$0xff]
    %v122 = vld [vmem:[#allocation2 + $0x268] sm:$0xff]
    %v123 = vld [vmem:[#allocation2 + $0x270] sm:$0xff]
    %v124 = vld [vmem:[#allocation2 + $0x278] sm:$0xff]
    %v125 = vld [vmem:[#allocation2 + $0x280] sm:$0xff]
    %v126 = vld [vmem:[#allocation2 + $0x288] sm:$0xff]
    %v127 = vld [vmem:[#allocation2 + $0x290] sm:$0xff]
    %v128 = vld [vmem:[#allocation2 + $0x298] sm:$0xff]
    %v129 = vld [vmem:[#allocation2 + $0x2a0] sm:$0xff]
    %v130 = vld [vmem:[#allocation2 + $0x2a8] sm:$0xff]
    %v131 = vld [vmem:[#allocation2 + $0x2b0] sm:$0xff]
    %v132 = vld [vmem:[#allocation2 + $0x2b8] sm:$0xff]
    %v133 = vld [vmem:[#allocation2 + $0x2c0] sm:$0xff]
    %v134 = vld [vmem:[#allocation2 + $0x2c8] sm:$0xff]
    %v135 = vld [vmem:[#allocation2 + $0x2d0] sm:$0xff]
    %v136 = vld [vmem:[#allocation2 + $0x2d8] sm:$0xff]
    %v137 = vld [vmem:[#allocation2 + $0x2e0] sm:$0xff]
    %v138 = vld [vmem:[#allocation2 + $0x2e8] sm:$0xff]
    %v139 = vld [vmem:[#allocation2 + $0x2f0] sm:$0xff]
    %v140 = vld [vmem:[#allocation2 + $0x2f8] sm:$0xff]
    %v141 = vld [vmem:[#allocation2 + $0x300] sm:$0xff]
    %v142 = vld [vmem:[#allocation2 + $0x308] sm:$0xff]
    %v143 = vld [vmem:[#allocation2 + $0x310] sm:$0xff]
    %v144 = vld [vmem:[#allocation2 + $0x318] sm:$0xff]
    %v145 = vld [vmem:[#allocation2 + $0x320] sm:$0xff]
    %v146 = vld [vmem:[#allocation2 + $0x328] sm:$0xff]
    %v147 = vld [vmem:[#allocation2 + $0x330] sm:$0xff]
    %v148 = vld [vmem:[#allocation2 + $0x338] sm:$0xff]
    %v149 = vld [vmem:[#allocation2 + $0x340] sm:$0xff]
    %v150 = vld [vmem:[#allocation2 + $0x348] sm:$0xff]
    %v151 = vld [vmem:[#allocation2 + $0x350] sm:$0xff]
    %v152 = vld [vmem:[#allocation2 + $0x358] sm:$0xff]
    %v153 = vld [vmem:[#allocation2 + $0x360] sm:$0xff]
    %v154 = vld [vmem:[#allocation2 + $0x368] sm:$0xff]
    %v155 = vld [vmem:[#allocation2 + $0x370] sm:$0xff]
    %v156 = vld [vmem:[#allocation2 + $0x378] sm:$0xff]
    %v157 = vld [vmem:[#allocation2 + $0x380] sm:$0xff]
    %v158 = vld [vmem:[#allocation2 + $0x388] sm:$0xff]
    %v159 = vld [vmem:[#allocation2 + $0x390] sm:$0xff]
    %v160 = vld [vmem:[#allocation2 + $0x398] sm:$0xff]
    %v161 = vld [vmem:[#allocation2 + $0x3a0] sm:$0xff]
    %v162 = vld [vmem:[#allocation2 + $0x3a8] sm:$0xff]
    %v163 = vld [vmem:[#allocation2 + $0x3b0] sm:$0xff]
    %v164 = vld [vmem:[#allocation2 + $0x3b8] sm:$0xff]
    %v165 = vld [vmem:[#allocation2 + $0x3c0] sm:$0xff]
    %v166 = vld [vmem:[#allocation2 + $0x3c8] sm:$0xff]
    %v167 = vld [vmem:[#allocation2 + $0x3d0] sm:$0xff]
    %v168 = vld [vmem:[#allocation2 + $0x3d8] sm:$0xff]
    %v169 = vld [vmem:[#allocation2 + $0x3e0] sm:$0xff]
    %v170 = vld [vmem:[#allocation2 + $0x3e8] sm:$0xff]
    %v171 = vld [vmem:[#allocation2 + $0x3f0] sm:$0xff]
    %v172 = vld [vmem:[#allocation2 + $0x3f8] sm:$0xff]
    %v173 = vld [vmem:[%s2] sm:$0x3]
    %v175 = vlaneseq
    %v176 = vshrl.u32 %v175, 7
    %v177 = vsub.s32 0, %v176
    %v178 = vrot.slane %v173, %v177
    %v179 = vlaneseq
    %v180 = vshrl.u32 %v179, 7
    %v181 = vsub.s32 1, %v180
    %v182 = vrot.slane %v173, %v181
    %v189 = vunpack.c.l.b16 %v41
    %v190 = vunpack.c.h.b16 %v41
    %v191 = vunpack.c.l.b16 %v42
    %v192 = vunpack.c.h.b16 %v42
    %v193 = vunpack.c.l.b16 %v43
    %v194 = vunpack.c.h.b16 %v43
    %v195 = vunpack.c.l.b16 %v44
    %v196 = vunpack.c.h.b16 %v44
    %v197 = vpack.c.b16 %v189, %v189
    %v198 = vpack.c.b16 %v190, %v190
    %v199 = vpack.c.b16 %v191, %v191
    %v200 = vpack.c.b16 %v192, %v192
    %v201 = vpack.c.b16 %v193, %v193
    %v202 = vpack.c.b16 %v194, %v194
    %v203 = vpack.c.b16 %v195, %v195
    %v204 = vpack.c.b16 %v196, %v196
    %v341 = vunpack.c.l.b16 %v45
    %v342 = vunpack.c.h.b16 %v45
    %v343 = vunpack.c.l.b16 %v46
    %v344 = vunpack.c.h.b16 %v46
    %v345 = vunpack.c.l.b16 %v47
    %v346 = vunpack.c.h.b16 %v47
    %v347 = vunpack.c.l.b16 %v48
    %v348 = vunpack.c.h.b16 %v48
    %v349 = vunpack.c.l.b16 %v49
    %v350 = vunpack.c.h.b16 %v49
    %v351 = vunpack.c.l.b16 %v50
    %v352 = vunpack.c.h.b16 %v50
    %v353 = vunpack.c.l.b16 %v51
    %v354 = vunpack.c.h.b16 %v51
    %v355 = vunpack.c.l.b16 %v52
    %v356 = vunpack.c.h.b16 %v52
    %v357 = vunpack.c.l.b16 %v53
    %v358 = vunpack.c.h.b16 %v53
    %v359 = vunpack.c.l.b16 %v54
    %v360 = vunpack.c.h.b16 %v54
    %v361 = vunpack.c.l.b16 %v55
    %v362 = vunpack.c.h.b16 %v55
    %v363 = vunpack.c.l.b16 %v56
    %v364 = vunpack.c.h.b16 %v56
    %v365 = vunpack.c.l.b16 %v57
    %v366 = vunpack.c.h.b16 %v57
    %v367 = vunpack.c.l.b16 %v58
    %v368 = vunpack.c.h.b16 %v58
    %v369 = vunpack.c.l.b16 %v59
    %v370 = vunpack.c.h.b16 %v59
    %v371 = vunpack.c.l.b16 %v60
    %v372 = vunpack.c.h.b16 %v60
    %v373 = vunpack.c.l.b16 %v61
    %v374 = vunpack.c.h.b16 %v61
    %v375 = vunpack.c.l.b16 %v62
    %v376 = vunpack.c.h.b16 %v62
    %v377 = vunpack.c.l.b16 %v63
    %v378 = vunpack.c.h.b16 %v63
    %v379 = vunpack.c.l.b16 %v64
    %v380 = vunpack.c.h.b16 %v64
    %v381 = vunpack.c.l.b16 %v65
    %v382 = vunpack.c.h.b16 %v65
    %v383 = vunpack.c.l.b16 %v66
    %v384 = vunpack.c.h.b16 %v66
    %v385 = vunpack.c.l.b16 %v67
    %v386 = vunpack.c.h.b16 %v67
    %v387 = vunpack.c.l.b16 %v68
    %v388 = vunpack.c.h.b16 %v68
    %v389 = vunpack.c.l.b16 %v69
    %v390 = vunpack.c.h.b16 %v69
    %v391 = vunpack.c.l.b16 %v70
    %v392 = vunpack.c.h.b16 %v70
    %v393 = vunpack.c.l.b16 %v71
    %v394 = vunpack.c.h.b16 %v71
    %v395 = vunpack.c.l.b16 %v72
    %v396 = vunpack.c.h.b16 %v72
    %v397 = vunpack.c.l.b16 %v73
    %v398 = vunpack.c.h.b16 %v73
    %v399 = vunpack.c.l.b16 %v74
    %v400 = vunpack.c.h.b16 %v74
    %v401 = vunpack.c.l.b16 %v75
    %v402 = vunpack.c.h.b16 %v75
    %v403 = vunpack.c.l.b16 %v76
    %v404 = vunpack.c.h.b16 %v76
    %v405 = vunpack.c.l.b16 %v77
    %v406 = vunpack.c.h.b16 %v77
    %v407 = vunpack.c.l.b16 %v78
    %v408 = vunpack.c.h.b16 %v78
    %v409 = vunpack.c.l.b16 %v79
    %v410 = vunpack.c.h.b16 %v79
    %v411 = vunpack.c.l.b16 %v80
    %v412 = vunpack.c.h.b16 %v80
    %v413 = vunpack.c.l.b16 %v81
    %v414 = vunpack.c.h.b16 %v81
    %v415 = vunpack.c.l.b16 %v82
    %v416 = vunpack.c.h.b16 %v82
    %v417 = vunpack.c.l.b16 %v83
    %v418 = vunpack.c.h.b16 %v83
    %v419 = vunpack.c.l.b16 %v84
    %v420 = vunpack.c.h.b16 %v84
    %v421 = vunpack.c.l.b16 %v85
    %v422 = vunpack.c.h.b16 %v85
    %v423 = vunpack.c.l.b16 %v86
    %v424 = vunpack.c.h.b16 %v86
    %v425 = vunpack.c.l.b16 %v87
    %v426 = vunpack.c.h.b16 %v87
    %v427 = vunpack.c.l.b16 %v88
    %v428 = vunpack.c.h.b16 %v88
    %v429 = vunpack.c.l.b16 %v89
    %v430 = vunpack.c.h.b16 %v89
    %v431 = vunpack.c.l.b16 %v90
    %v432 = vunpack.c.h.b16 %v90
    %v433 = vunpack.c.l.b16 %v91
    %v434 = vunpack.c.h.b16 %v91
    %v435 = vunpack.c.l.b16 %v92
    %v436 = vunpack.c.h.b16 %v92
    %v437 = vunpack.c.l.b16 %v93
    %v438 = vunpack.c.h.b16 %v93
    %v439 = vunpack.c.l.b16 %v94
    %v440 = vunpack.c.h.b16 %v94
    %v441 = vunpack.c.l.b16 %v95
    %v442 = vunpack.c.h.b16 %v95
    %v443 = vunpack.c.l.b16 %v96
    %v444 = vunpack.c.h.b16 %v96
    %v445 = vunpack.c.l.b16 %v97
    %v446 = vunpack.c.h.b16 %v97
    %v447 = vunpack.c.l.b16 %v98
    %v448 = vunpack.c.h.b16 %v98
    %v449 = vunpack.c.l.b16 %v99
    %v450 = vunpack.c.h.b16 %v99
    %v451 = vunpack.c.l.b16 %v100
    %v452 = vunpack.c.h.b16 %v100
    %v453 = vunpack.c.l.b16 %v101
    %v454 = vunpack.c.h.b16 %v101
    %v455 = vunpack.c.l.b16 %v102
    %v456 = vunpack.c.h.b16 %v102
    %v457 = vunpack.c.l.b16 %v103
    %v458 = vunpack.c.h.b16 %v103
    %v459 = vunpack.c.l.b16 %v104
    %v460 = vunpack.c.h.b16 %v104
    %v461 = vunpack.c.l.b16 %v105
    %v462 = vunpack.c.h.b16 %v105
    %v463 = vunpack.c.l.b16 %v106
    %v464 = vunpack.c.h.b16 %v106
    %v465 = vunpack.c.l.b16 %v107
    %v466 = vunpack.c.h.b16 %v107
    %v467 = vunpack.c.l.b16 %v108
    %v468 = vunpack.c.h.b16 %v108
    %v469 = vunpack.c.l.b16 %v109
    %v470 = vunpack.c.h.b16 %v109
    %v471 = vunpack.c.l.b16 %v110
    %v472 = vunpack.c.h.b16 %v110
    %v473 = vunpack.c.l.b16 %v111
    %v474 = vunpack.c.h.b16 %v111
    %v475 = vunpack.c.l.b16 %v112
    %v476 = vunpack.c.h.b16 %v112
    %v477 = vunpack.c.l.b16 %v113
    %v478 = vunpack.c.h.b16 %v113
    %v479 = vunpack.c.l.b16 %v114
    %v480 = vunpack.c.h.b16 %v114
    %v481 = vunpack.c.l.b16 %v115
    %v482 = vunpack.c.h.b16 %v115
    %v483 = vunpack.c.l.b16 %v116
    %v484 = vunpack.c.h.b16 %v116
    %v485 = vunpack.c.l.b16 %v117
    %v486 = vunpack.c.h.b16 %v117
    %v487 = vunpack.c.l.b16 %v118
    %v488 = vunpack.c.h.b16 %v118
    %v489 = vunpack.c.l.b16 %v119
    %v490 = vunpack.c.h.b16 %v119
    %v491 = vunpack.c.l.b16 %v120
    %v492 = vunpack.c.h.b16 %v120
    %v493 = vunpack.c.l.b16 %v121
    %v494 = vunpack.c.h.b16 %v121
    %v495 = vunpack.c.l.b16 %v122
    %v496 = vunpack.c.h.b16 %v122
    %v497 = vunpack.c.l.b16 %v123
    %v498 = vunpack.c.h.b16 %v123
    %v499 = vunpack.c.l.b16 %v124
    %v500 = vunpack.c.h.b16 %v124
    %v501 = vunpack.c.l.b16 %v125
    %v502 = vunpack.c.h.b16 %v125
    %v503 = vunpack.c.l.b16 %v126
    %v504 = vunpack.c.h.b16 %v126
    %v505 = vunpack.c.l.b16 %v127
    %v506 = vunpack.c.h.b16 %v127
    %v507 = vunpack.c.l.b16 %v128
    %v508 = vunpack.c.h.b16 %v128
    %v509 = vunpack.c.l.b16 %v129
    %v510 = vunpack.c.h.b16 %v129
    %v511 = vunpack.c.l.b16 %v130
    %v512 = vunpack.c.h.b16 %v130
    %v513 = vunpack.c.l.b16 %v131
    %v514 = vunpack.c.h.b16 %v131
    %v515 = vunpack.c.l.b16 %v132
    %v516 = vunpack.c.h.b16 %v132
    %v517 = vunpack.c.l.b16 %v133
    %v518 = vunpack.c.h.b16 %v133
    %v519 = vunpack.c.l.b16 %v134
    %v520 = vunpack.c.h.b16 %v134
    %v521 = vunpack.c.l.b16 %v135
    %v522 = vunpack.c.h.b16 %v135
    %v523 = vunpack.c.l.b16 %v136
    %v524 = vunpack.c.h.b16 %v136
    %v525 = vunpack.c.l.b16 %v137
    %v526 = vunpack.c.h.b16 %v137
    %v527 = vunpack.c.l.b16 %v138
    %v528 = vunpack.c.h.b16 %v138
    %v529 = vunpack.c.l.b16 %v139
    %v530 = vunpack.c.h.b16 %v139
    %v531 = vunpack.c.l.b16 %v140
    %v532 = vunpack.c.h.b16 %v140
    %v533 = vunpack.c.l.b16 %v141
    %v534 = vunpack.c.h.b16 %v141
    %v535 = vunpack.c.l.b16 %v142
    %v536 = vunpack.c.h.b16 %v142
    %v537 = vunpack.c.l.b16 %v143
    %v538 = vunpack.c.h.b16 %v143
    %v539 = vunpack.c.l.b16 %v144
    %v540 = vunpack.c.h.b16 %v144
    %v541 = vunpack.c.l.b16 %v145
    %v542 = vunpack.c.h.b16 %v145
    %v543 = vunpack.c.l.b16 %v146
    %v544 = vunpack.c.h.b16 %v146
    %v545 = vunpack.c.l.b16 %v147
    %v546 = vunpack.c.h.b16 %v147
    %v547 = vunpack.c.l.b16 %v148
    %v548 = vunpack.c.h.b16 %v148
    %v549 = vunpack.c.l.b16 %v149
    %v550 = vunpack.c.h.b16 %v149
    %v551 = vunpack.c.l.b16 %v150
    %v552 = vunpack.c.h.b16 %v150
    %v553 = vunpack.c.l.b16 %v151
    %v554 = vunpack.c.h.b16 %v151
    %v555 = vunpack.c.l.b16 %v152
    %v556 = vunpack.c.h.b16 %v152
    %v557 = vunpack.c.l.b16 %v153
    %v558 = vunpack.c.h.b16 %v153
    %v559 = vunpack.c.l.b16 %v154
    %v560 = vunpack.c.h.b16 %v154
    %v561 = vunpack.c.l.b16 %v155
    %v562 = vunpack.c.h.b16 %v155
    %v563 = vunpack.c.l.b16 %v156
    %v564 = vunpack.c.h.b16 %v156
    %v565 = vunpack.c.l.b16 %v157
    %v566 = vunpack.c.h.b16 %v157
    %v567 = vunpack.c.l.b16 %v158
    %v568 = vunpack.c.h.b16 %v158
    %v569 = vunpack.c.l.b16 %v159
    %v570 = vunpack.c.h.b16 %v159
    %v571 = vunpack.c.l.b16 %v160
    %v572 = vunpack.c.h.b16 %v160
    %v573 = vunpack.c.l.b16 %v161
    %v574 = vunpack.c.h.b16 %v161
    %v575 = vunpack.c.l.b16 %v162
    %v576 = vunpack.c.h.b16 %v162
    %v577 = vunpack.c.l.b16 %v163
    %v578 = vunpack.c.h.b16 %v163
    %v579 = vunpack.c.l.b16 %v164
    %v580 = vunpack.c.h.b16 %v164
    %v581 = vunpack.c.l.b16 %v165
    %v582 = vunpack.c.h.b16 %v165
    %v583 = vunpack.c.l.b16 %v166
    %v584 = vunpack.c.h.b16 %v166
    %v585 = vunpack.c.l.b16 %v167
    %v586 = vunpack.c.h.b16 %v167
    %v587 = vunpack.c.l.b16 %v168
    %v588 = vunpack.c.h.b16 %v168
    %v589 = vunpack.c.l.b16 %v169
    %v590 = vunpack.c.h.b16 %v169
    %v591 = vunpack.c.l.b16 %v170
    %v592 = vunpack.c.h.b16 %v170
    %v593 = vunpack.c.l.b16 %v171
    %v594 = vunpack.c.h.b16 %v171
    %v595 = vunpack.c.l.b16 %v172
    %v596 = vunpack.c.h.b16 %v172
    %v597 = vpack.c.b16 %v343, %v341
    %v598 = vpack.c.b16 %v344, %v342
    %v599 = vpack.c.b16 %v347, %v345
    %v600 = vpack.c.b16 %v348, %v346
    %v601 = vpack.c.b16 %v351, %v349
    %v602 = vpack.c.b16 %v352, %v350
    %v603 = vpack.c.b16 %v355, %v353
    %v604 = vpack.c.b16 %v356, %v354
    %v605 = vpack.c.b16 %v359, %v357
    %v606 = vpack.c.b16 %v360, %v358
    %v607 = vpack.c.b16 %v363, %v361
    %v608 = vpack.c.b16 %v364, %v362
    %v609 = vpack.c.b16 %v367, %v365
    %v610 = vpack.c.b16 %v368, %v366
    %v611 = vpack.c.b16 %v371, %v369
    %v612 = vpack.c.b16 %v372, %v370
    %v613 = vpack.c.b16 %v375, %v373
    %v614 = vpack.c.b16 %v376, %v374
    %v615 = vpack.c.b16 %v379, %v377
    %v616 = vpack.c.b16 %v380, %v378
    %v617 = vpack.c.b16 %v383, %v381
    %v618 = vpack.c.b16 %v384, %v382
    %v619 = vpack.c.b16 %v387, %v385
    %v620 = vpack.c.b16 %v388, %v386
    %v621 = vpack.c.b16 %v391, %v389
    %v622 = vpack.c.b16 %v392, %v390
    %v623 = vpack.c.b16 %v395, %v393
    %v624 = vpack.c.b16 %v396, %v394
    %v625 = vpack.c.b16 %v399, %v397
    %v626 = vpack.c.b16 %v400, %v398
    %v627 = vpack.c.b16 %v403, %v401
    %v628 = vpack.c.b16 %v404, %v402
    %v629 = vpack.c.b16 %v407, %v405
    %v630 = vpack.c.b16 %v408, %v406
    %v631 = vpack.c.b16 %v411, %v409
    %v632 = vpack.c.b16 %v412, %v410
    %v633 = vpack.c.b16 %v415, %v413
    %v634 = vpack.c.b16 %v416, %v414
    %v635 = vpack.c.b16 %v419, %v417
    %v636 = vpack.c.b16 %v420, %v418
    %v637 = vpack.c.b16 %v423, %v421
    %v638 = vpack.c.b16 %v424, %v422
    %v639 = vpack.c.b16 %v427, %v425
    %v640 = vpack.c.b16 %v428, %v426
    %v641 = vpack.c.b16 %v431, %v429
    %v642 = vpack.c.b16 %v432, %v430
    %v643 = vpack.c.b16 %v435, %v433
    %v644 = vpack.c.b16 %v436, %v434
    %v645 = vpack.c.b16 %v439, %v437
    %v646 = vpack.c.b16 %v440, %v438
    %v647 = vpack.c.b16 %v443, %v441
    %v648 = vpack.c.b16 %v444, %v442
    %v649 = vpack.c.b16 %v447, %v445
    %v650 = vpack.c.b16 %v448, %v446
    %v651 = vpack.c.b16 %v451, %v449
    %v652 = vpack.c.b16 %v452, %v450
    %v653 = vpack.c.b16 %v455, %v453
    %v654 = vpack.c.b16 %v456, %v454
    %v655 = vpack.c.b16 %v459, %v457
    %v656 = vpack.c.b16 %v460, %v458
    %v657 = vpack.c.b16 %v463, %v461
    %v658 = vpack.c.b16 %v464, %v462
    %v659 = vpack.c.b16 %v467, %v465
    %v660 = vpack.c.b16 %v468, %v466
    %v661 = vpack.c.b16 %v471, %v469
    %v662 = vpack.c.b16 %v472, %v470
    %v663 = vpack.c.b16 %v475, %v473
    %v664 = vpack.c.b16 %v476, %v474
    %v665 = vpack.c.b16 %v479, %v477
    %v666 = vpack.c.b16 %v480, %v478
    %v667 = vpack.c.b16 %v483, %v481
    %v668 = vpack.c.b16 %v484, %v482
    %v669 = vpack.c.b16 %v487, %v485
    %v670 = vpack.c.b16 %v488, %v486
    %v671 = vpack.c.b16 %v491, %v489
    %v672 = vpack.c.b16 %v492, %v490
    %v673 = vpack.c.b16 %v495, %v493
    %v674 = vpack.c.b16 %v496, %v494
    %v675 = vpack.c.b16 %v499, %v497
    %v676 = vpack.c.b16 %v500, %v498
    %v677 = vpack.c.b16 %v503, %v501
    %v678 = vpack.c.b16 %v504, %v502
    %v679 = vpack.c.b16 %v507, %v505
    %v680 = vpack.c.b16 %v508, %v506
    %v681 = vpack.c.b16 %v511, %v509
    %v682 = vpack.c.b16 %v512, %v510
    %v683 = vpack.c.b16 %v515, %v513
    %v684 = vpack.c.b16 %v516, %v514
    %v685 = vpack.c.b16 %v519, %v517
    %v686 = vpack.c.b16 %v520, %v518
    %v687 = vpack.c.b16 %v523, %v521
    %v688 = vpack.c.b16 %v524, %v522
    %v689 = vpack.c.b16 %v527, %v525
    %v690 = vpack.c.b16 %v528, %v526
    %v691 = vpack.c.b16 %v531, %v529
    %v692 = vpack.c.b16 %v532, %v530
    %v693 = vpack.c.b16 %v535, %v533
    %v694 = vpack.c.b16 %v536, %v534
    %v695 = vpack.c.b16 %v539, %v537
    %v696 = vpack.c.b16 %v540, %v538
    %v697 = vpack.c.b16 %v543, %v541
    %v698 = vpack.c.b16 %v544, %v542
    %v699 = vpack.c.b16 %v547, %v545
    %v700 = vpack.c.b16 %v548, %v546
    %v701 = vpack.c.b16 %v551, %v549
    %v702 = vpack.c.b16 %v552, %v550
    %v703 = vpack.c.b16 %v555, %v553
    %v704 = vpack.c.b16 %v556, %v554
    %v705 = vpack.c.b16 %v559, %v557
    %v706 = vpack.c.b16 %v560, %v558
    %v707 = vpack.c.b16 %v563, %v561
    %v708 = vpack.c.b16 %v564, %v562
    %v709 = vpack.c.b16 %v567, %v565
    %v710 = vpack.c.b16 %v568, %v566
    %v711 = vpack.c.b16 %v571, %v569
    %v712 = vpack.c.b16 %v572, %v570
    %v713 = vpack.c.b16 %v575, %v573
    %v714 = vpack.c.b16 %v576, %v574
    %v715 = vpack.c.b16 %v579, %v577
    %v716 = vpack.c.b16 %v580, %v578
    %v717 = vpack.c.b16 %v583, %v581
    %v718 = vpack.c.b16 %v584, %v582
    %v719 = vpack.c.b16 %v587, %v585
    %v720 = vpack.c.b16 %v588, %v586
    %v721 = vpack.c.b16 %v591, %v589
    %v722 = vpack.c.b16 %v592, %v590
    %v723 = vpack.c.b16 %v595, %v593
    %v724 = vpack.c.b16 %v596, %v594
    %853 = vmatprep.subr.bf16.mxu0 %v612
    %854 = vmatpush1.bf16.msra.mxu0 %v611
    %855 = vmatprep.subr.bf16.mxu0 %v610
    %856 = vmatpush1.bf16.msra.mxu0 %v609
    %857 = vmatprep.subr.bf16.mxu0 %v608
    %858 = vmatpush1.bf16.msra.mxu0 %v607
    %859 = vmatprep.subr.bf16.mxu0 %v606
    %860 = vmatpush1.bf16.msra.mxu0 %v605
    %861 = vmatprep.subr.bf16.mxu0 %v604
    %862 = vmatpush1.bf16.msra.mxu0 %v603
    %863 = vmatprep.subr.bf16.mxu0 %v602
    %864 = vmatpush1.bf16.msra.mxu0 %v601
    %865 = vmatprep.subr.bf16.mxu0 %v600
    %866 = vmatpush1.bf16.msra.mxu0 %v599
    %867 = vmatprep.subr.bf16.mxu0 %v598
    %868 = vmatpush1.bf16.msra.mxu0 %v597
    %869 = vmatprep.subr.bf16.mxu0 %v628
    %870 = vmatpush2.bf16.msra.mxu0 %v627
    %871 = vmatprep.subr.bf16.mxu0 %v626
    %872 = vmatpush2.bf16.msra.mxu0 %v625
    %873 = vmatprep.subr.bf16.mxu0 %v624
    %874 = vmatpush2.bf16.msra.mxu0 %v623
    %875 = vmatprep.subr.bf16.mxu0 %v622
    %876 = vmatpush2.bf16.msra.mxu0 %v621
    %877 = vmatprep.subr.bf16.mxu0 %v620
    %878 = vmatpush2.bf16.msra.mxu0 %v619
    %879 = vmatprep.subr.bf16.mxu0 %v618
    %880 = vmatpush2.bf16.msra.mxu0 %v617
    %881 = vmatprep.subr.bf16.mxu0 %v616
    %882 = vmatpush2.bf16.msra.mxu0 %v615
    %883 = vmatprep.subr.bf16.mxu0 %v614
    %884 = vmatpush2.bf16.msra.mxu0 %v613
    %885 = vmatprep.mubr.bf16.mxu0 %v198
    %886 = vmatmul.mubr.bf16.gmra.mxu0 %v197
    %v887 = vpop.f32.mrf.mxu0
    %v888 = vadd.f32 %v178, %v887
    %v889 = vpop.f32.mrf.mxu0
    %v890 = vadd.f32 %v182, %v889
    %v891 = vpop.f32.mrf.mxu0
    %v892 = vpop.f32.mrf.mxu0
    %893 = vdwg.mxu0
    %894 = vmatprep.subr.bf16.mxu0 %v644
    %895 = vmatpush1.bf16.msra.mxu0 %v643
    %896 = vmatprep.subr.bf16.mxu0 %v642
    %897 = vmatpush1.bf16.msra.mxu0 %v641
    %898 = vmatprep.subr.bf16.mxu0 %v640
    %899 = vmatpush1.bf16.msra.mxu0 %v639
    %900 = vmatprep.subr.bf16.mxu0 %v638
    %901 = vmatpush1.bf16.msra.mxu0 %v637
    %902 = vmatprep.subr.bf16.mxu0 %v636
    %903 = vmatpush1.bf16.msra.mxu0 %v635
    %904 = vmatprep.subr.bf16.mxu0 %v634
    %905 = vmatpush1.bf16.msra.mxu0 %v633
    %906 = vmatprep.subr.bf16.mxu0 %v632
    %907 = vmatpush1.bf16.msra.mxu0 %v631
    %908 = vmatprep.subr.bf16.mxu0 %v630
    %909 = vmatpush1.bf16.msra.mxu0 %v629
    %910 = vmatprep.subr.bf16.mxu0 %v660
    %911 = vmatpush2.bf16.msra.mxu0 %v659
    %912 = vmatprep.subr.bf16.mxu0 %v658
    %913 = vmatpush2.bf16.msra.mxu0 %v657
    %914 = vmatprep.subr.bf16.mxu0 %v656
    %915 = vmatpush2.bf16.msra.mxu0 %v655
    %916 = vmatprep.subr.bf16.mxu0 %v654
    %917 = vmatpush2.bf16.msra.mxu0 %v653
    %918 = vmatprep.subr.bf16.mxu0 %v652
    %919 = vmatpush2.bf16.msra.mxu0 %v651
    %920 = vmatprep.subr.bf16.mxu0 %v650
    %921 = vmatpush2.bf16.msra.mxu0 %v649
    %922 = vmatprep.subr.bf16.mxu0 %v648
    %923 = vmatpush2.bf16.msra.mxu0 %v647
    %924 = vmatprep.subr.bf16.mxu0 %v646
    %925 = vmatpush2.bf16.msra.mxu0 %v645
    %926 = vmatprep.mubr.bf16.mxu0 %v200
    %927 = vmatmul.mubr.bf16.gmra.mxu0 %v199
    %v928 = vpop.f32.mrf.mxu0
    %v929 = vadd.f32 %v888, %v928
    %v930 = vpop.f32.mrf.mxu0
    %v931 = vadd.f32 %v890, %v930
    %v932 = vpop.f32.mrf.mxu0
    %v933 = vpop.f32.mrf.mxu0
    %934 = vdwg.mxu0
    %935 = vmatprep.subr.bf16.mxu0 %v676
    %936 = vmatpush1.bf16.msra.mxu0 %v675
    %937 = vmatprep.subr.bf16.mxu0 %v674
    %938 = vmatpush1.bf16.msra.mxu0 %v673
    %939 = vmatprep.subr.bf16.mxu0 %v672
    %940 = vmatpush1.bf16.msra.mxu0 %v671
    %941 = vmatprep.subr.bf16.mxu0 %v670
    %942 = vmatpush1.bf16.msra.mxu0 %v669
    %943 = vmatprep.subr.bf16.mxu0 %v668
    %944 = vmatpush1.bf16.msra.mxu0 %v667
    %945 = vmatprep.subr.bf16.mxu0 %v666
    %946 = vmatpush1.bf16.msra.mxu0 %v665
    %947 = vmatprep.subr.bf16.mxu0 %v664
    %948 = vmatpush1.bf16.msra.mxu0 %v663
    %949 = vmatprep.subr.bf16.mxu0 %v662
    %950 = vmatpush1.bf16.msra.mxu0 %v661
    %951 = vmatprep.subr.bf16.mxu0 %v692
    %952 = vmatpush2.bf16.msra.mxu0 %v691
    %953 = vmatprep.subr.bf16.mxu0 %v690
    %954 = vmatpush2.bf16.msra.mxu0 %v689
    %955 = vmatprep.subr.bf16.mxu0 %v688
    %956 = vmatpush2.bf16.msra.mxu0 %v687
    %957 = vmatprep.subr.bf16.mxu0 %v686
    %958 = vmatpush2.bf16.msra.mxu0 %v685
    %959 = vmatprep.subr.bf16.mxu0 %v684
    %960 = vmatpush2.bf16.msra.mxu0 %v683
    %961 = vmatprep.subr.bf16.mxu0 %v682
    %962 = vmatpush2.bf16.msra.mxu0 %v681
    %963 = vmatprep.subr.bf16.mxu0 %v680
    %964 = vmatpush2.bf16.msra.mxu0 %v679
    %965 = vmatprep.subr.bf16.mxu0 %v678
    %966 = vmatpush2.bf16.msra.mxu0 %v677
    %967 = vmatprep.mubr.bf16.mxu0 %v202
    %968 = vmatmul.mubr.bf16.gmra.mxu0 %v201
    %v969 = vpop.f32.mrf.mxu0
    %v970 = vadd.f32 %v929, %v969
    %v971 = vpop.f32.mrf.mxu0
    %v972 = vadd.f32 %v931, %v971
    %v973 = vpop.f32.mrf.mxu0
    %v974 = vpop.f32.mrf.mxu0
    %975 = vdwg.mxu0
    %976 = vmatprep.subr.bf16.mxu0 %v708
    %977 = vmatpush1.bf16.msra.mxu0 %v707
    %978 = vmatprep.subr.bf16.mxu0 %v706
    %979 = vmatpush1.bf16.msra.mxu0 %v705
    %980 = vmatprep.subr.bf16.mxu0 %v704
    %981 = vmatpush1.bf16.msra.mxu0 %v703
    %982 = vmatprep.subr.bf16.mxu0 %v702
    %983 = vmatpush1.bf16.msra.mxu0 %v701
    %984 = vmatprep.subr.bf16.mxu0 %v700
    %985 = vmatpush1.bf16.msra.mxu0 %v699
    %986 = vmatprep.subr.bf16.mxu0 %v698
    %987 = vmatpush1.bf16.msra.mxu0 %v697
    %988 = vmatprep.subr.bf16.mxu0 %v696
    %989 = vmatpush1.bf16.msra.mxu0 %v695
    %990 = vmatprep.subr.bf16.mxu0 %v694
    %991 = vmatpush1.bf16.msra.mxu0 %v693
    %992 = vmatprep.subr.bf16.mxu0 %v724
    %993 = vmatpush2.bf16.msra.mxu0 %v723
    %994 = vmatprep.subr.bf16.mxu0 %v722
    %995 = vmatpush2.bf16.msra.mxu0 %v721
    %996 = vmatprep.subr.bf16.mxu0 %v720
    %997 = vmatpush2.bf16.msra.mxu0 %v719
    %998 = vmatprep.subr.bf16.mxu0 %v718
    %999 = vmatpush2.bf16.msra.mxu0 %v717
    %1000 = vmatprep.subr.bf16.mxu0 %v716
    %1001 = vmatpush2.bf16.msra.mxu0 %v715
    %1002 = vmatprep.subr.bf16.mxu0 %v714
    %1003 = vmatpush2.bf16.msra.mxu0 %v713
    %1004 = vmatprep.subr.bf16.mxu0 %v712
    %1005 = vmatpush2.bf16.msra.mxu0 %v711
    %1006 = vmatprep.subr.bf16.mxu0 %v710
    %1007 = vmatpush2.bf16.msra.mxu0 %v709
    %1008 = vmatprep.mubr.bf16.mxu0 %v204
    %1009 = vmatmul.mubr.bf16.gmra.mxu0 %v203
    %v1010 = vpop.f32.mrf.mxu0
    %v1011 = vadd.f32 %v970, %v1010
    %v1012 = vpop.f32.mrf.mxu0
    %v1013 = vadd.f32 %v972, %v1012
    %v1014 = vpop.f32.mrf.mxu0
    %v1015 = vpop.f32.mrf.mxu0
    %1016 = vdwg.mxu0
    %v1017 = vtanh.pop %v1011
    %v1018 = vtanh.pop %v1013
    %v1019 = vpack.c.bf16 %v1017, %v1017
    %v1020 = vpack.c.bf16 %v1018, %v1018
    %v1021 = vld [vmem:[%s3] sm:$0xf]
    %v1022 = vld [vmem:[%s3 + $0x4] sm:$0xf]
    %v1023 = vld [vmem:[%s3 + $0x8] sm:$0xf]
    %v1024 = vld [vmem:[%s3 + $0xc] sm:$0xf]
    %v1025 = vld [vmem:[%s3 + $0x10] sm:$0xf]
    %v1026 = vld [vmem:[%s3 + $0x14] sm:$0xf]
    %v1027 = vld [vmem:[%s3 + $0x18] sm:$0xf]
    %v1028 = vld [vmem:[%s3 + $0x1c] sm:$0xf]
    %v1029 = vld [vmem:[%s3 + $0x20] sm:$0xf]
    %v1030 = vld [vmem:[%s3 + $0x24] sm:$0xf]
    %v1031 = vld [vmem:[%s3 + $0x28] sm:$0xf]
    %v1032 = vld [vmem:[%s3 + $0x2c] sm:$0xf]
    %v1033 = vld [vmem:[%s3 + $0x30] sm:$0xf]
    %v1034 = vld [vmem:[%s3 + $0x34] sm:$0xf]
    %v1035 = vld [vmem:[%s3 + $0x38] sm:$0xf]
    %v1036 = vld [vmem:[%s3 + $0x3c] sm:$0xf]
    %v1037 = vld [vmem:[%s3 + $0x40] sm:$0xf]
    %v1038 = vld [vmem:[%s3 + $0x44] sm:$0xf]
    %v1039 = vld [vmem:[%s3 + $0x48] sm:$0xf]
    %v1040 = vld [vmem:[%s3 + $0x4c] sm:$0xf]
    %v1041 = vld [vmem:[%s3 + $0x50] sm:$0xf]
    %v1042 = vld [vmem:[%s3 + $0x54] sm:$0xf]
    %v1043 = vld [vmem:[%s3 + $0x58] sm:$0xf]
    %v1044 = vld [vmem:[%s3 + $0x5c] sm:$0xf]
    %v1045 = vld [vmem:[%s3 + $0x60] sm:$0xf]
    %v1046 = vld [vmem:[%s3 + $0x64] sm:$0xf]
    %v1047 = vld [vmem:[%s3 + $0x68] sm:$0xf]
    %v1048 = vld [vmem:[%s3 + $0x6c] sm:$0xf]
    %v1049 = vld [vmem:[%s3 + $0x70] sm:$0xf]
    %v1050 = vld [vmem:[%s3 + $0x74] sm:$0xf]
    %v1051 = vld [vmem:[%s3 + $0x78] sm:$0xf]
    %v1052 = vld [vmem:[%s3 + $0x7c] sm:$0xf]
    %v1053 = vld [vmem:[%s4] sm:$0x1]
    %v1055 = vlaneseq
    %v1056 = vshrl.u32 %v1055, 7
    %v1057 = vsub.s32 0, %v1056
    %v1058 = vrot.slane %v1053, %v1057
    %v1092 = vunpack.c.l.b16 %v1021
    %v1093 = vunpack.c.l.b16 %v1022
    %v1094 = vunpack.c.l.b16 %v1023
    %v1095 = vunpack.c.l.b16 %v1024
    %v1096 = vunpack.c.l.b16 %v1025
    %v1097 = vunpack.c.l.b16 %v1026
    %v1098 = vunpack.c.l.b16 %v1027
    %v1099 = vunpack.c.l.b16 %v1028
    %v1100 = vunpack.c.l.b16 %v1029
    %v1101 = vunpack.c.l.b16 %v1030
    %v1102 = vunpack.c.l.b16 %v1031
    %v1103 = vunpack.c.l.b16 %v1032
    %v1104 = vunpack.c.l.b16 %v1033
    %v1105 = vunpack.c.l.b16 %v1034
    %v1106 = vunpack.c.l.b16 %v1035
    %v1107 = vunpack.c.l.b16 %v1036
    %v1108 = vunpack.c.l.b16 %v1037
    %v1109 = vunpack.c.l.b16 %v1038
    %v1110 = vunpack.c.l.b16 %v1039
    %v1111 = vunpack.c.l.b16 %v1040
    %v1112 = vunpack.c.l.b16 %v1041
    %v1113 = vunpack.c.l.b16 %v1042
    %v1114 = vunpack.c.l.b16 %v1043
    %v1115 = vunpack.c.l.b16 %v1044
    %v1116 = vunpack.c.l.b16 %v1045
    %v1117 = vunpack.c.l.b16 %v1046
    %v1118 = vunpack.c.l.b16 %v1047
    %v1119 = vunpack.c.l.b16 %v1048
    %v1120 = vunpack.c.l.b16 %v1049
    %v1121 = vunpack.c.l.b16 %v1050
    %v1122 = vunpack.c.l.b16 %v1051
    %v1123 = vunpack.c.l.b16 %v1052
    %v1124 = vpack.c.b16 %v1093, %v1092
    %v1125 = vpack.c.b16 %v1095, %v1094
    %v1126 = vpack.c.b16 %v1097, %v1096
    %v1127 = vpack.c.b16 %v1099, %v1098
    %v1128 = vpack.c.b16 %v1101, %v1100
    %v1129 = vpack.c.b16 %v1103, %v1102
    %v1130 = vpack.c.b16 %v1105, %v1104
    %v1131 = vpack.c.b16 %v1107, %v1106
    %v1132 = vpack.c.b16 %v1109, %v1108
    %v1133 = vpack.c.b16 %v1111, %v1110
    %v1134 = vpack.c.b16 %v1113, %v1112
    %v1135 = vpack.c.b16 %v1115, %v1114
    %v1136 = vpack.c.b16 %v1117, %v1116
    %v1137 = vpack.c.b16 %v1119, %v1118
    %v1138 = vpack.c.b16 %v1121, %v1120
    %v1139 = vpack.c.b16 %v1123, %v1122
    %1156 = vmatprep.subr.bf16.mxu0 0
    %1157 = vmatpush1.bf16.msra.mxu0 %v1131
    %1158 = vmatprep.subr.bf16.mxu0 0
    %1159 = vmatpush1.bf16.msra.mxu0 %v1130
    %1160 = vmatprep.subr.bf16.mxu0 0
    %1161 = vmatpush1.bf16.msra.mxu0 %v1129
    %1162 = vmatprep.subr.bf16.mxu0 0
    %1163 = vmatpush1.bf16.msra.mxu0 %v1128
    %1164 = vmatprep.subr.bf16.mxu0 0
    %1165 = vmatpush1.bf16.msra.mxu0 %v1127
    %1166 = vmatprep.subr.bf16.mxu0 0
    %1167 = vmatpush1.bf16.msra.mxu0 %v1126
    %1168 = vmatprep.subr.bf16.mxu0 0
    %1169 = vmatpush1.bf16.msra.mxu0 %v1125
    %1170 = vmatprep.subr.bf16.mxu0 0
    %1171 = vmatpush1.bf16.msra.mxu0 %v1124
    %1172 = vmatprep.subr.bf16.mxu0 0
    %1173 = vmatpush2.bf16.msra.mxu0 %v1139
    %1174 = vmatprep.subr.bf16.mxu0 0
    %1175 = vmatpush2.bf16.msra.mxu0 %v1138
    %1176 = vmatprep.subr.bf16.mxu0 0
    %1177 = vmatpush2.bf16.msra.mxu0 %v1137
    %1178 = vmatprep.subr.bf16.mxu0 0
    %1179 = vmatpush2.bf16.msra.mxu0 %v1136
    %1180 = vmatprep.subr.bf16.mxu0 0
    %1181 = vmatpush2.bf16.msra.mxu0 %v1135
    %1182 = vmatprep.subr.bf16.mxu0 0
    %1183 = vmatpush2.bf16.msra.mxu0 %v1134
    %1184 = vmatprep.subr.bf16.mxu0 0
    %1185 = vmatpush2.bf16.msra.mxu0 %v1133
    %1186 = vmatprep.subr.bf16.mxu0 0
    %1187 = vmatpush2.bf16.msra.mxu0 %v1132
    %1188 = vmatprep.mubr.bf16.mxu0 %v1020
    %1189 = vmatmul.mubr.bf16.gmra.mxu0 %v1019
    %v1190 = vpop.f32.mrf.mxu0
    %v1191 = vadd.f32 %v1058, %v1190
    %v1192 = vpop.f32.mrf.mxu0
    %v1193 = vpop.f32.mrf.mxu0
    %v1194 = vpop.f32.mrf.mxu0
    %1195 = vdwg.mxu0
    %v1196 = vtanh.pop %v1191
    %v1197 = vpack.c.bf16 %v1196, %v1196
    %v1198 = vld [vmem:[%s5] sm:$0xf]
    %v1199 = vld [vmem:[%s5 + $0x4] sm:$0xf]
    %v1200 = vld [vmem:[%s5 + $0x8] sm:$0xf]
    %v1201 = vld [vmem:[%s5 + $0xc] sm:$0xf]
    %v1202 = vld [vmem:[%s5 + $0x10] sm:$0xf]
    %v1203 = vld [vmem:[%s5 + $0x14] sm:$0xf]
    %v1204 = vld [vmem:[%s5 + $0x18] sm:$0xf]
    %v1205 = vld [vmem:[%s5 + $0x1c] sm:$0xf]
    %v1206 = vld [vmem:[%s5 + $0x20] sm:$0xf]
    %v1207 = vld [vmem:[%s5 + $0x24] sm:$0xf]
    %v1208 = vld [vmem:[%s5 + $0x28] sm:$0xf]
    %v1209 = vld [vmem:[%s5 + $0x2c] sm:$0xf]
    %v1210 = vld [vmem:[%s5 + $0x30] sm:$0xf]
    %v1211 = vld [vmem:[%s5 + $0x34] sm:$0xf]
    %v1212 = vld [vmem:[%s5 + $0x38] sm:$0xf]
    %v1213 = vld [vmem:[%s5 + $0x3c] sm:$0xf]
    %v1214 = vld [vmem:[%s6] sm:$0x1]
    %v1216 = vlaneseq
    %v1217 = vshrl.u32 %v1216, 7
    %v1218 = vsub.s32 0, %v1217
    %v1219 = vrot.slane %v1214, %v1218
    %v1237 = vunpack.c.l.b16 %v1198
    %v1238 = vunpack.c.l.b16 %v1199
    %v1239 = vunpack.c.l.b16 %v1200
    %v1240 = vunpack.c.l.b16 %v1201
    %v1241 = vunpack.c.l.b16 %v1202
    %v1242 = vunpack.c.l.b16 %v1203
    %v1243 = vunpack.c.l.b16 %v1204
    %v1244 = vunpack.c.l.b16 %v1205
    %v1245 = vunpack.c.l.b16 %v1206
    %v1246 = vunpack.c.l.b16 %v1207
    %v1247 = vunpack.c.l.b16 %v1208
    %v1248 = vunpack.c.l.b16 %v1209
    %v1249 = vunpack.c.l.b16 %v1210
    %v1250 = vunpack.c.l.b16 %v1211
    %v1251 = vunpack.c.l.b16 %v1212
    %v1252 = vunpack.c.l.b16 %v1213
    %v1253 = vpack.c.b16 %v1238, %v1237
    %v1254 = vpack.c.b16 %v1240, %v1239
    %v1255 = vpack.c.b16 %v1242, %v1241
    %v1256 = vpack.c.b16 %v1244, %v1243
    %v1257 = vpack.c.b16 %v1246, %v1245
    %v1258 = vpack.c.b16 %v1248, %v1247
    %v1259 = vpack.c.b16 %v1250, %v1249
    %v1260 = vpack.c.b16 %v1252, %v1251
    %1269 = vmatprep.subr.bf16.mxu0 0
    %1270 = vmatpush1.bf16.msra.mxu0 %v1260
    %1271 = vmatprep.subr.bf16.mxu0 0
    %1272 = vmatpush1.bf16.msra.mxu0 %v1259
    %1273 = vmatprep.subr.bf16.mxu0 0
    %1274 = vmatpush1.bf16.msra.mxu0 %v1258
    %1275 = vmatprep.subr.bf16.mxu0 0
    %1276 = vmatpush1.bf16.msra.mxu0 %v1257
    %1277 = vmatprep.subr.bf16.mxu0 0
    %1278 = vmatpush1.bf16.msra.mxu0 %v1256
    %1279 = vmatprep.subr.bf16.mxu0 0
    %1280 = vmatpush1.bf16.msra.mxu0 %v1255
    %1281 = vmatprep.subr.bf16.mxu0 0
    %1282 = vmatpush1.bf16.msra.mxu0 %v1254
    %1283 = vmatprep.subr.bf16.mxu0 0
    %1284 = vmatpush1.bf16.msra.mxu0 %v1253
    %1285 = vmatprep.subr.bf16.mxu0 0
    %1286 = vmatpush2.bf16.msra.mxu0 0
    %1287 = vmatprep.subr.bf16.mxu0 0
    %1288 = vmatpush2.bf16.msra.mxu0 0
    %1289 = vmatprep.subr.bf16.mxu0 0
    %1290 = vmatpush2.bf16.msra.mxu0 0
    %1291 = vmatprep.subr.bf16.mxu0 0
    %1292 = vmatpush2.bf16.msra.mxu0 0
    %1293 = vmatprep.subr.bf16.mxu0 0
    %1294 = vmatpush2.bf16.msra.mxu0 0
    %1295 = vmatprep.subr.bf16.mxu0 0
    %1296 = vmatpush2.bf16.msra.mxu0 0
    %1297 = vmatprep.subr.bf16.mxu0 0
    %1298 = vmatpush2.bf16.msra.mxu0 0
    %1299 = vmatprep.subr.bf16.mxu0 0
    %1300 = vmatpush2.bf16.msra.mxu0 0
    %1301 = vmatprep.mubr.bf16.mxu0 0
    %1302 = vmatmul.mubr.bf16.gmra.mxu0 %v1197
    %v1303 = vpop.f32.mrf.mxu0
    %v1304 = vadd.f32 %v1219, %v1303
    %v1305 = vpop.f32.mrf.mxu0
    %v1306 = vpop.f32.mrf.mxu0
    %v1307 = vpop.f32.mrf.mxu0
    %1308 = vdwg.mxu0
    %1309 = vst [vmem:[%s7] sm:$0xff] %v1304
    // Predicated region
    $region34: #{mlp_forward.1} parent=1 // pred_check
      _
    $region35: #{mlp_forward.1} parent=1 // pred_check_branch
      %1311 = sbr.rel (0) target = $region37
    $region36: #{mlp_forward.1} parent=1 // pred_region
      _
    $region37: #{mlp_forward.1} parent=1 // pred_fallthru
      _
    // Predicated region
    $region38: #{mlp_forward.1} parent=1 // pred_check
      _
    $region39: #{mlp_forward.1} parent=1 // pred_check_branch
      %1313 = sbr.rel (0) target = $region41
    $region40: #{mlp_forward.1} parent=1 // pred_region
      _
    $region41: #{mlp_forward.1} parent=1 // pred_fallthru
      _
    %1314 = vsyncpa [#allocation3], 1

</llo_original>
